<compile_context>
chip_gen: v5e
topology: v5e:2x2
jax: 0.10.0
libtpu: 0.0.40
codegen_flags: <defaults>
</compile_context>

<pallas_src>
import functools

import jax
import jax.numpy as jnp
from jax.experimental import pallas as pl
from jax.experimental.pallas import tpu as pltpu


def _round_up(x, m):
    return ((x + m - 1) // m) * m


def _pad2d(x, rows, cols):
    """Zero-pad a 2-D array up to (rows, cols)."""
    r, c = x.shape
    return jnp.pad(x, ((0, rows - r), (0, cols - c)))


# ---------------------------------------------------------------------------
# Kernel
# ---------------------------------------------------------------------------
def _critic_kernel(s_ref, a_ref, w1_ref, b1_ref, w2h_ref, w2a_ref, b2_ref,
                   w3_ref, b3_ref, o_ref):
    cd = w1_ref.dtype  # compute dtype for the MXU passes (bf16 by default)

    # Layer 1: h1 = relu(states @ W1^T + b1); f32 accumulate, f32 VPU math.
    h1 = jnp.dot(s_ref[...], w1_ref[...], preferred_element_type=jnp.float32)
    h1 = jnp.maximum(h1 + b1_ref[...], 0.0)                    # (Bt, H1p) f32

    # Layer 2: concat([h1, actions]) @ W2^T  ==  h1 @ W2h^T + actions @ W2a^T
    # where W2h / W2a are the h1-rows / action-rows of W2^T packed separately.
    # Padding lanes are harmless: padded h1 lanes hit zero rows of w2h and
    # padded action lanes hit zero rows of w2a.
    z2 = jnp.dot(h1.astype(cd), w2h_ref[...],
                 preferred_element_type=jnp.float32)
    z2 = z2 + jnp.dot(a_ref[...], w2a_ref[...],
                      preferred_element_type=jnp.float32)
    h2 = jnp.maximum(z2 + b2_ref[...], 0.0)                    # (Bt, H2p) f32

    # Layer 3 (single Q value): VPU multiply + cross-lane reduce (XLU) against
    # the f32 W3 row; only an 8-lane output tile is ever materialized/stored.
    q = jnp.sum(h2 * w3_ref[...], axis=-1, keepdims=True)      # (Bt, 1) f32
    o_ref[...] = q + b3_ref[...]                               # (Bt, Ow) f32


# ---------------------------------------------------------------------------
# One-time weight packing (hoisted out of the per-call path)
# ---------------------------------------------------------------------------
def pack_critic_params(params, *, compute_dtype=jnp.bfloat16):
    """Pre-transpose + zero-pad weights into TPU-friendly tiles (done once).

    Lane layout is derived entirely from the weight shapes, so there is no
    separate `hidden1` argument that could drift out of sync with the kernel.
    """
    w1, b1, w2, b2, w3, b3 = (params["w1"], params["b1"], params["w2"],
                              params["b2"], params["w3"], params["b3"])
    hidden1, n_states = w1.shape
    hidden2 = w2.shape[0]
    n_actions = w2.shape[1] - hidden1
    assert n_actions >= 1
    assert w3.shape == (1, hidden2), "module has a single Q-value output"

    Sw = _round_up(n_states, 8)      # states lane width (narrow, not 128)
    Aw = _round_up(n_actions, 8)     # actions lane width
    H1p = _round_up(hidden1, 128)
    H2p = _round_up(hidden2, 128)
    Ow = 8                           # output lane width (q lives in lane 0)

    return {
        "w1":  _pad2d(w1.T, Sw, H1p).astype(compute_dtype),             # (Sw, H1p)
        "b1":  _pad2d(b1[None, :], 1, H1p).astype(jnp.float32),         # (1, H1p)
        "w2h": _pad2d(w2[:, :hidden1].T, H1p, H2p).astype(compute_dtype),  # (H1p, H2p)
        "w2a": _pad2d(w2[:, hidden1:].T, Aw, H2p).astype(compute_dtype),   # (Aw, H2p)
        "b2":  _pad2d(b2[None, :], 1, H2p).astype(jnp.float32),         # (1, H2p)
        "w3":  _pad2d(w3, 1, H2p).astype(jnp.float32),                  # (1, H2p) f32 (VPU path)
        "b3":  _pad2d(b3[None, :], 1, Ow).astype(jnp.float32),          # (1, Ow)
    }


# ---------------------------------------------------------------------------
# Forward wrapper
# ---------------------------------------------------------------------------
@functools.partial(jax.jit, static_argnames=("block_b",))
def critic_forward(states, actions, packed, *, block_b=2048):
    """states: (B, n_states) f32, actions: (B, n_actions) f32 -> (B, 1) f32."""
    B, ns = states.shape
    na = actions.shape[1]
    Sw, H1p = packed["w1"].shape
    Aw, H2p = packed["w2a"].shape
    Ow = packed["b3"].shape[1]
    cd = packed["w1"].dtype

    # Loud failure instead of silently-wrong lane layout on a width mismatch.
    assert actions.shape[0] == B
    assert _round_up(ns, 8) == Sw, "states width does not match packed params"
    assert _round_up(na, 8) == Aw, "actions width does not match packed params"

    # ---- batch tiling -----------------------------------------------------
    B8 = _round_up(B, 8)
    Bt = min(_round_up(block_b, 8), B8)
    if B8 >= 16 and B8 <= Bt:
        # Prefer >=2 grid steps so the "parallel" batch axis can shard across
        # both TensorCores on v7x (an extra ~0.35us step is noise on v5e/v6e).
        Bt = _round_up((B8 + 1) // 2, 8)
    steps = pl.cdiv(B8, Bt)
    Bp = steps * Bt
    grid = (steps,)

    # Per-call activation prep only: narrow 8-lane streams, bf16 once.
    s_p = _pad2d(states, Bp, Sw).astype(cd)
    a_p = _pad2d(actions, Bp, Aw).astype(cd)

    flops = 2 * Bp * (Sw * H1p + H1p * H2p + Aw * H2p + H2p)
    bytes_accessed = (
        s_p.size * s_p.dtype.itemsize
        + a_p.size * a_p.dtype.itemsize
        + sum(v.size * v.dtype.itemsize for v in packed.values())
        + Bp * Ow * 4
    )

    batched = lambda w: pl.BlockSpec((Bt, w), lambda i: (i, 0))
    resident = lambda r, c: pl.BlockSpec((r, c), lambda i: (0, 0))

    out_p = pl.pallas_call(
        _critic_kernel,
        out_shape=jax.ShapeDtypeStruct((Bp, Ow), jnp.float32),
        grid=grid,
        in_specs=[
            batched(Sw),              # states tile  (Bt, Sw)
            batched(Aw),              # actions tile (Bt, Aw)
            resident(Sw, H1p),        # W1^T           (VMEM-resident)
            resident(1, H1p),         # b1
            resident(H1p, H2p),       # W2^T, h1 rows
            resident(Aw, H2p),        # W2^T, action rows
            resident(1, H2p),         # b2
            resident(1, H2p),         # W3 row (f32)
            resident(1, Ow),          # b3
        ],
        out_specs=batched(Ow),
        compiler_params=pltpu.CompilerParams(
            dimension_semantics=("parallel",)),
        cost_estimate=pl.CostEstimate(
            flops=flops, transcendentals=0, bytes_accessed=bytes_accessed),
    )(s_p, a_p, packed["w1"], packed["b1"], packed["w2h"], packed["w2a"],
      packed["b2"], packed["w3"], packed["b3"])

    return out_p[:B, :1]


# ---------------------------------------------------------------------------
# Parameter init (same shapes / init scheme as the PyTorch module)
# ---------------------------------------------------------------------------
def init_critic_params(key, n_states=5, n_actions=1, hidden1=50, hidden2=20):
    """Xavier-uniform weights, zero biases (matches the PyTorch module)."""
    def xavier(k, out_f, in_f):
        bound = jnp.sqrt(6.0 / (in_f + out_f))
        return jax.random.uniform(k, (out_f, in_f), jnp.float32, -bound, bound)

    k1, k2, k3 = jax.random.split(key, 3)
    return {
        "w1": xavier(k1, hidden1, n_states),
        "b1": jnp.zeros((hidden1,), jnp.float32),
        "w2": xavier(k2, hidden2, hidden1 + n_actions),
        "b2": jnp.zeros((hidden2,), jnp.float32),
        "w3": xavier(k3, 1, hidden2),
        "b3": jnp.zeros((1,), jnp.float32),
    }


def _reference_forward(states, actions, p):
    h1 = jax.nn.relu(states @ p["w1"].T + p["b1"])
    cat = jnp.concatenate([h1, actions], axis=-1)
    h2 = jax.nn.relu(cat @ p["w2"].T + p["b2"])
    return h2 @ p["w3"].T + p["b3"]


if __name__ == "__main__":
    key = jax.random.PRNGKey(0)
    kp, ks, ka, ks2, ka2 = jax.random.split(key, 5)

    n_states, n_actions, hidden1, hidden2 = 5, 1, 50, 20
    params = init_critic_params(kp, n_states=n_states, n_actions=n_actions,
                                hidden1=hidden1, hidden2=hidden2)
    packed = pack_critic_params(params)

    # Small batch -> single grid step.
    B = 8
    states = jax.random.normal(ks, (B, n_states), jnp.float32)
    actions = jax.random.normal(ka, (B, n_actions), jnp.float32)
    q = jax.block_until_ready(critic_forward(states, actions, packed))
    q_ref = _reference_forward(states, actions, params)
    assert q.shape == (B, 1)
    # bf16 MXU inputs with f32 accumulation -> relaxed tolerance vs f32 ref.
    assert jnp.allclose(q, q_ref, atol=5e-2, rtol=5e-2), \
        float(jnp.max(jnp.abs(q - q_ref)))

    # Larger, non-multiple batch; default config -> 2 parallel grid steps.
    B2 = 300
    states2 = jax.random.normal(ks2, (B2, n_states), jnp.float32)
    actions2 = jax.random.normal(ka2, (B2, n_actions), jnp.float32)
    q2 = jax.block_until_ready(critic_forward(states2, actions2, packed))
    q2_ref = _reference_forward(states2, actions2, params)
    assert q2.shape == (B2, 1)
    assert jnp.allclose(q2, q2_ref, atol=5e-2, rtol=5e-2), \
        float(jnp.max(jnp.abs(q2 - q2_ref)))

    # Same batch with a small tile to exercise a 3-step pipelined grid.
    q3 = jax.block_until_ready(
        critic_forward(states2, actions2, packed, block_b=128))
    assert jnp.allclose(q3, q2_ref, atol=5e-2, rtol=5e-2), \
        float(jnp.max(jnp.abs(q3 - q2_ref)))

    print("KERNEL_OK")
</pallas_src>

<mosaic_0001>
module attributes {stable_mosaic.version = 11 : i64} {
  func.func @_critic_kernel(%arg0: i32, %arg1: memref<8x8xbf16, #tpu.memory_space<vmem>>, %arg2: memref<8x8xbf16, #tpu.memory_space<vmem>>, %arg3: memref<8x128xbf16, #tpu.memory_space<vmem>>, %arg4: memref<1x128xf32, #tpu.memory_space<vmem>>, %arg5: memref<128x128xbf16, #tpu.memory_space<vmem>>, %arg6: memref<8x128xbf16, #tpu.memory_space<vmem>>, %arg7: memref<1x128xf32, #tpu.memory_space<vmem>>, %arg8: memref<1x128xf32, #tpu.memory_space<vmem>>, %arg9: memref<1x8xf32, #tpu.memory_space<vmem>>, %arg10: memref<8x8xf32, #tpu.memory_space<vmem>>) attributes {dimension_semantics = [#tpu.dimension_semantics<parallel>], iteration_bounds = array<i64: 1>, scalar_prefetch = 0 : i64, scratch_operands = 0 : i64, tpu.core_type = #tpu.core_type<tc>, window_params = [{transform_indices = @transform_0, window_bounds = array<i64: 8, 8>}, {transform_indices = @transform_1, window_bounds = array<i64: 8, 8>}, {pipeline_mode = #tpu.pipeline_mode<synchronous>, transform_indices = @transform_2, window_bounds = array<i64: 8, 128>}, {pipeline_mode = #tpu.pipeline_mode<synchronous>, transform_indices = @transform_3, window_bounds = array<i64: 1, 128>}, {pipeline_mode = #tpu.pipeline_mode<synchronous>, transform_indices = @transform_4, window_bounds = array<i64: 128, 128>}, {pipeline_mode = #tpu.pipeline_mode<synchronous>, transform_indices = @transform_5, window_bounds = array<i64: 8, 128>}, {pipeline_mode = #tpu.pipeline_mode<synchronous>, transform_indices = @transform_6, window_bounds = array<i64: 1, 128>}, {pipeline_mode = #tpu.pipeline_mode<synchronous>, transform_indices = @transform_7, window_bounds = array<i64: 1, 128>}, {pipeline_mode = #tpu.pipeline_mode<synchronous>, transform_indices = @transform_8, window_bounds = array<i64: 1, 8>}, {transform_indices = @transform_9, window_bounds = array<i64: 8, 8>}]} {
    %c0 = arith.constant 0 : index
    %c0_0 = arith.constant 0 : index
    %0 = vector.load %arg1[%c0, %c0_0] : memref<8x8xbf16, #tpu.memory_space<vmem>>, vector<8x8xbf16>
    %c0_1 = arith.constant 0 : index
    %c0_2 = arith.constant 0 : index
    %1 = vector.load %arg3[%c0_1, %c0_2] : memref<8x128xbf16, #tpu.memory_space<vmem>>, vector<8x128xbf16>
    %cst = arith.constant dense<0.000000e+00> : vector<8x128xf32>
    %2 = tpu.matmul %0, %1, %cst {dimension_numbers = #tpu.dot_dimension_numbers<[1], [0], [0], [1], [0, 0, 1, 1], [], []>} : vector<8x8xbf16>, vector<8x128xbf16>, vector<8x128xf32> -> vector<8x128xf32>
    %c0_3 = arith.constant 0 : index
    %c0_4 = arith.constant 0 : index
    %3 = vector.load %arg4[%c0_3, %c0_4] : memref<1x128xf32, #tpu.memory_space<vmem>>, vector<1x128xf32>
    %4 = vector.broadcast %3 : vector<1x128xf32> to vector<8x128xf32>
    %5 = arith.addf %2, %4 : vector<8x128xf32>
    %cst_5 = arith.constant 0.000000e+00 : f32
    %6 = vector.broadcast %cst_5 : f32 to vector<8x128xf32>
    %7 = arith.maximumf %5, %6 : vector<8x128xf32>
    %8 = arith.truncf %7 : vector<8x128xf32> to vector<8x128xbf16>
    %c0_6 = arith.constant 0 : index
    %c0_7 = arith.constant 0 : index
    %9 = vector.load %arg5[%c0_6, %c0_7] : memref<128x128xbf16, #tpu.memory_space<vmem>>, vector<128x128xbf16>
    %cst_8 = arith.constant dense<0.000000e+00> : vector<8x128xf32>
    %10 = tpu.matmul %8, %9, %cst_8 {dimension_numbers = #tpu.dot_dimension_numbers<[1], [0], [0], [1], [0, 0, 1, 1], [], []>} : vector<8x128xbf16>, vector<128x128xbf16>, vector<8x128xf32> -> vector<8x128xf32>
    %c0_9 = arith.constant 0 : index
    %c0_10 = arith.constant 0 : index
    %11 = vector.load %arg2[%c0_9, %c0_10] : memref<8x8xbf16, #tpu.memory_space<vmem>>, vector<8x8xbf16>
    %c0_11 = arith.constant 0 : index
    %c0_12 = arith.constant 0 : index
    %12 = vector.load %arg6[%c0_11, %c0_12] : memref<8x128xbf16, #tpu.memory_space<vmem>>, vector<8x128xbf16>
    %cst_13 = arith.constant dense<0.000000e+00> : vector<8x128xf32>
    %13 = tpu.matmul %11, %12, %cst_13 {dimension_numbers = #tpu.dot_dimension_numbers<[1], [0], [0], [1], [0, 0, 1, 1], [], []>} : vector<8x8xbf16>, vector<8x128xbf16>, vector<8x128xf32> -> vector<8x128xf32>
    %14 = arith.addf %10, %13 : vector<8x128xf32>
    %c0_14 = arith.constant 0 : index
    %c0_15 = arith.constant 0 : index
    %15 = vector.load %arg7[%c0_14, %c0_15] : memref<1x128xf32, #tpu.memory_space<vmem>>, vector<1x128xf32>
    %16 = vector.broadcast %15 : vector<1x128xf32> to vector<8x128xf32>
    %17 = arith.addf %14, %16 : vector<8x128xf32>
    %cst_16 = arith.constant 0.000000e+00 : f32
    %18 = vector.broadcast %cst_16 : f32 to vector<8x128xf32>
    %19 = arith.maximumf %17, %18 : vector<8x128xf32>
    %c0_17 = arith.constant 0 : index
    %c0_18 = arith.constant 0 : index
    %20 = vector.load %arg8[%c0_17, %c0_18] : memref<1x128xf32, #tpu.memory_space<vmem>>, vector<1x128xf32>
    %21 = vector.broadcast %20 : vector<1x128xf32> to vector<8x128xf32>
    %22 = arith.mulf %19, %21 : vector<8x128xf32>
    %cst_19 = arith.constant dense<0.000000e+00> : vector<8xf32>
    %23 = vector.multi_reduction <add>, %22, %cst_19 [1] : vector<8x128xf32> to vector<8xf32>
    %24 = vector.shape_cast %23 : vector<8xf32> to vector<8x1xf32>
    %c0_20 = arith.constant 0 : index
    %c0_21 = arith.constant 0 : index
    %25 = vector.load %arg9[%c0_20, %c0_21] : memref<1x8xf32, #tpu.memory_space<vmem>>, vector<1x8xf32>
    %26 = vector.broadcast %24 : vector<8x1xf32> to vector<8x8xf32>
    %27 = vector.broadcast %25 : vector<1x8xf32> to vector<8x8xf32>
    %28 = arith.addf %26, %27 : vector<8x8xf32>
    %c0_22 = arith.constant 0 : index
    %c0_23 = arith.constant 0 : index
    %29 = vector.load %arg10[%c0_22, %c0_23] : memref<8x8xf32, #tpu.memory_space<vmem>>, vector<8x8xf32>
    tpu.vector_store %arg10[%c0_22, %c0_23], %28 {strides = array<i32>} : memref<8x8xf32, #tpu.memory_space<vmem>>, vector<8x8xf32>,
    return
  }
  func.func @transform_0(%arg0: i32) -> (i32, i32) {
    %c0_i32 = arith.constant 0 : i32
    %c0_i32_0 = arith.constant 0 : i32
    return %arg0, %c0_i32 : i32, i32
  }
  func.func @transform_1(%arg0: i32) -> (i32, i32) {
    %c0_i32 = arith.constant 0 : i32
    %c0_i32_0 = arith.constant 0 : i32
    return %arg0, %c0_i32 : i32, i32
  }
  func.func @transform_2(%arg0: i32) -> (i32, i32) {
    %c0_i32 = arith.constant 0 : i32
    %c0_i32_0 = arith.constant 0 : i32
    %c0_i32_1 = arith.constant 0 : i32
    return %c0_i32, %c0_i32_0 : i32, i32
  }
  func.func @transform_3(%arg0: i32) -> (i32, i32) {
    %c0_i32 = arith.constant 0 : i32
    %c0_i32_0 = arith.constant 0 : i32
    %c0_i32_1 = arith.constant 0 : i32
    return %c0_i32, %c0_i32_0 : i32, i32
  }
  func.func @transform_4(%arg0: i32) -> (i32, i32) {
    %c0_i32 = arith.constant 0 : i32
    %c0_i32_0 = arith.constant 0 : i32
    %c0_i32_1 = arith.constant 0 : i32
    return %c0_i32, %c0_i32_0 : i32, i32
  }
  func.func @transform_5(%arg0: i32) -> (i32, i32) {
    %c0_i32 = arith.constant 0 : i32
    %c0_i32_0 = arith.constant 0 : i32
    %c0_i32_1 = arith.constant 0 : i32
    return %c0_i32, %c0_i32_0 : i32, i32
  }
  func.func @transform_6(%arg0: i32) -> (i32, i32) {
    %c0_i32 = arith.constant 0 : i32
    %c0_i32_0 = arith.constant 0 : i32
    %c0_i32_1 = arith.constant 0 : i32
    return %c0_i32, %c0_i32_0 : i32, i32
  }
  func.func @transform_7(%arg0: i32) -> (i32, i32) {
    %c0_i32 = arith.constant 0 : i32
    %c0_i32_0 = arith.constant 0 : i32
    %c0_i32_1 = arith.constant 0 : i32
    return %c0_i32, %c0_i32_0 : i32, i32
  }
  func.func @transform_8(%arg0: i32) -> (i32, i32) {
    %c0_i32 = arith.constant 0 : i32
    %c0_i32_0 = arith.constant 0 : i32
    %c0_i32_1 = arith.constant 0 : i32
    return %c0_i32, %c0_i32_0 : i32, i32
  }
  func.func @transform_9(%arg0: i32) -> (i32, i32) {
    %c0_i32 = arith.constant 0 : i32
    %c0_i32_0 = arith.constant 0 : i32
    return %arg0, %c0_i32 : i32, i32
  }
}

</mosaic_0001>

<llo_original>
// kernel: critic_forward.1
$region0: #{critic_forward.1}
  #allocation0 [shape = 'u32[]', space=smem, size = 0x4, offset = 0x4, fixed_abs, tag = 'smem constant byte address 0x4 - core index']
  #allocation1 [shape = 'u32[72,128]{1,0:T(1,128)}', space=vmem, size = 0x9000, scoped, tag = 'internal scratch']
  %s0 = inlined_call_operand.vmem [shape: bf16[8,8], index: 0, kind: input, shape index: {}]
  %s1 = inlined_call_operand.vmem [shape: bf16[8,8], index: 1, kind: input, shape index: {}]
  %s2 = inlined_call_operand.vmem [shape: bf16[8,128], index: 2, kind: input, shape index: {}]
  %s3 = inlined_call_operand.vmem [shape: f32[1,128], index: 3, kind: input, shape index: {}]
  %s4 = inlined_call_operand.hbm [shape: bf16[128,128], index: 4, kind: input, shape index: {}]
  %s5 = inlined_call_operand.vmem [shape: bf16[8,128], index: 5, kind: input, shape index: {}]
  %s6 = inlined_call_operand.vmem [shape: f32[1,128], index: 6, kind: input, shape index: {}]
  %s7 = inlined_call_operand.vmem [shape: f32[1,128], index: 7, kind: input, shape index: {}]
  %s8 = inlined_call_operand.vmem [shape: f32[1,8], index: 8, kind: input, shape index: {}]
  %s9 = inlined_call_operand.vmem [shape: f32[8,8], index: 9, kind: output, shape index: {}]
  %s10 = sld [smem:[#allocation0]]
  $region50: #{critic_forward.1} parent=0
    _
  %s12 = ssub.s32 1, %s10
  %s13 = scalar_select 0, %s12, %s10
  $region1: #{critic_forward.1} parent=0
    #allocation2 [shape = 'u8[32768]{0}', space=vmem, size = 0x8000, scoped, tag = 'input window, operand 4, single buffered']
    #allocation3 [shape = 's32[1]{0}', space=sflag, size = 0x4, scoped, tag = 'scoped memory for critic_forward.1']
    %14 = vsyncpa [#allocation3], 0
    // Predicated region
    $region2: #{critic_forward.1} parent=1 // pred_check
      _
    $region3: #{critic_forward.1} parent=1 // pred_check_branch
      %16 = sbr.rel (0) target = $region5
    $region4: #{critic_forward.1} parent=1 // pred_region
      _
    $region5: #{critic_forward.1} parent=1 // pred_fallthru
      _
    // Predicated region
    $region6: #{critic_forward.1} parent=1 // pred_check
      _
    $region7: #{critic_forward.1} parent=1 // pred_check_branch
      %18 = sbr.rel (0) target = $region9
    $region8: #{critic_forward.1} parent=1 // pred_region
      _
    $region9: #{critic_forward.1} parent=1 // pred_fallthru
      _
    // Predicated region
    $region10: #{critic_forward.1} parent=1 // pred_check
      _
    $region11: #{critic_forward.1} parent=1 // pred_check_branch
      %20 = sbr.rel (0) target = $region13
    $region12: #{critic_forward.1} parent=1 // pred_region
      _
    $region13: #{critic_forward.1} parent=1 // pred_fallthru
      _
    // Predicated region
    $region14: #{critic_forward.1} parent=1 // pred_check
      _
    $region15: #{critic_forward.1} parent=1 // pred_check_branch
      %22 = sbr.rel (0) target = $region17
    $region16: #{critic_forward.1} parent=1 // pred_region
      _
    $region17: #{critic_forward.1} parent=1 // pred_fallthru
      _
    // Predicated region
    $region18: #{critic_forward.1} parent=1 // pred_check
      _
    $region19: #{critic_forward.1} parent=1 // pred_check_branch
      %24 = sbr.rel (0) target = $region21
    $region20: #{critic_forward.1} parent=1 // pred_region
      %26 = vsyncadd [#allocation3], 0
      %s27 = sshll.u32 %s4, 4
      %s28 = int_to_ptr.hbm [resolvable:$true] %s27
      %s29 = sshll.u32 [#allocation2], 4
      %s30 = int_to_ptr.vmem [resolvable:$true] %s29
      %35 = dma.hbm_to_vmem [thread:$0]  %s28, 1024, %s30, [#allocation3], 64, 64, 4
    $region21: #{critic_forward.1} parent=1 // pred_fallthru
      _
    // Predicated region
    $region22: #{critic_forward.1} parent=1 // pred_check
      _
    $region23: #{critic_forward.1} parent=1 // pred_check_branch
      %37 = sbr.rel (0) target = $region25
    $region24: #{critic_forward.1} parent=1 // pred_region
      _
    $region25: #{critic_forward.1} parent=1 // pred_fallthru
      _
    // Predicated region
    $region26: #{critic_forward.1} parent=1 // pred_check
      _
    $region27: #{critic_forward.1} parent=1 // pred_check_branch
      %39 = sbr.rel (0) target = $region29
    $region28: #{critic_forward.1} parent=1 // pred_region
      _
    $region29: #{critic_forward.1} parent=1 // pred_fallthru
      _
    // Predicated region
    $region30: #{critic_forward.1} parent=1 // pred_check
      _
    $region31: #{critic_forward.1} parent=1 // pred_check_branch
      %41 = sbr.rel (0) target = $region33
    $region32: #{critic_forward.1} parent=1 // pred_region
      _
    $region33: #{critic_forward.1} parent=1 // pred_fallthru
      _
    // Predicated region
    $region34: #{critic_forward.1} parent=1 // pred_check
      _
    $region35: #{critic_forward.1} parent=1 // pred_check_branch
      %43 = sbr.rel (0) target = $region37
    $region36: #{critic_forward.1} parent=1 // pred_region
      _
    $region37: #{critic_forward.1} parent=1 // pred_fallthru
      _
    // Predicated region
    $region38: #{critic_forward.1} parent=1 // pred_check
      _
    $region39: #{critic_forward.1} parent=1 // pred_check_branch
      %45 = sbr.rel (0) target = $region41
    $region40: #{critic_forward.1} parent=1 // pred_region
      %47 = dma.done [#allocation3], 1024
    $region41: #{critic_forward.1} parent=1 // pred_fallthru
      _
    %v49 = vld [vmem:[%s0] sm:$0xf]
    %v50 = vld [vmem:[%s2] sm:$0xf]
    %v51 = vld [vmem:[%s3] sm:$0x1]
    %v53 = vperm.slane %v51, 0
    %vm55 = vcmask 64512
    %v57 = vsel %vm55, %v49, 0
    %vm59 = vcmask 1043456
    %v61 = vsel %vm59, %v50, 0
    %63 = vmatpush.bf16.msra.mxu0 0
    %64 = vmatpush.bf16.msra.mxu0 0
    %65 = vmatpush.bf16.msra.mxu0 0
    %66 = vmatpush.bf16.msra.mxu0 0
    %67 = vmatpush.bf16.msra.mxu0 0
    %68 = vmatpush.bf16.msra.mxu0 0
    %69 = vmatpush.bf16.msra.mxu0 0
    %70 = vmatpush.bf16.msra.mxu0 %v61
    %71 = vmatmul.bf16.gmra.mxu0 %v57
    %v72 = vpop.f32.mrf.mxu0
    %v73 = vadd.f32 %v53, %v72
    %v74 = vpop.f32.mrf.mxu0
    %75 = vdwg.mxu0
    %v76 = vmax.f32 %v73, 0.0
    %v77 = vpack.c.bf16 %v76, %v76
    %v78 = vld [vmem:[#allocation2] sm:$0xf]
    %v79 = vld [vmem:[#allocation2 + $0x4] sm:$0xf]
    %v80 = vld [vmem:[#allocation2 + $0x8] sm:$0xf]
    %v81 = vld [vmem:[#allocation2 + $0xc] sm:$0xf]
    %v82 = vld [vmem:[#allocation2 + $0x10] sm:$0xf]
    %v83 = vld [vmem:[#allocation2 + $0x14] sm:$0xf]
    %v84 = vld [vmem:[#allocation2 + $0x18] sm:$0xf]
    %v85 = vld [vmem:[#allocation2 + $0x1c] sm:$0xf]
    %v86 = vld [vmem:[#allocation2 + $0x20] sm:$0xf]
    %v87 = vld [vmem:[#allocation2 + $0x24] sm:$0xf]
    %v88 = vld [vmem:[#allocation2 + $0x28] sm:$0xf]
    %v89 = vld [vmem:[#allocation2 + $0x2c] sm:$0xf]
    %v90 = vld [vmem:[#allocation2 + $0x30] sm:$0xf]
    %v91 = vld [vmem:[#allocation2 + $0x34] sm:$0xf]
    %v92 = vld [vmem:[#allocation2 + $0x38] sm:$0xf]
    %v93 = vld [vmem:[#allocation2 + $0x3c] sm:$0xf]
    %v94 = vld [vmem:[%s1] sm:$0xf]
    %v95 = vld [vmem:[%s5] sm:$0xf]
    %v97 = vsel %vm55, %v94, 0
    %v100 = vsel %vm59, %v95, 0
    %102 = vmatpush.bf16.msra.mxu0 0
    %103 = vmatpush.bf16.msra.mxu0 0
    %104 = vmatpush.bf16.msra.mxu0 0
    %105 = vmatpush.bf16.msra.mxu0 0
    %106 = vmatpush.bf16.msra.mxu0 0
    %107 = vmatpush.bf16.msra.mxu0 0
    %108 = vmatpush.bf16.msra.mxu0 0
    %109 = vmatpush.bf16.msra.mxu0 %v100
    %110 = vmatmul.bf16.gmra.mxu0 %v97
    %v111 = vpop.f32.mrf.mxu0
    %v112 = vadd.f32 0.0, %v111
    %v113 = vpop.f32.mrf.mxu0
    %114 = vdwg.mxu0
    %v131 = vunpack.c.l.b16 %v78
    %v132 = vunpack.c.l.b16 %v79
    %v133 = vunpack.c.l.b16 %v80
    %v134 = vunpack.c.l.b16 %v81
    %v135 = vunpack.c.l.b16 %v82
    %v136 = vunpack.c.l.b16 %v83
    %v137 = vunpack.c.l.b16 %v84
    %v138 = vunpack.c.l.b16 %v85
    %v139 = vunpack.c.l.b16 %v86
    %v140 = vunpack.c.l.b16 %v87
    %v141 = vunpack.c.l.b16 %v88
    %v142 = vunpack.c.l.b16 %v89
    %v143 = vunpack.c.l.b16 %v90
    %v144 = vunpack.c.l.b16 %v91
    %v145 = vunpack.c.l.b16 %v92
    %v146 = vunpack.c.l.b16 %v93
    %v147 = vpack.c.b16 %v132, %v131
    %v148 = vpack.c.b16 %v134, %v133
    %v149 = vpack.c.b16 %v136, %v135
    %v150 = vpack.c.b16 %v138, %v137
    %v151 = vpack.c.b16 %v140, %v139
    %v152 = vpack.c.b16 %v142, %v141
    %v153 = vpack.c.b16 %v144, %v143
    %v154 = vpack.c.b16 %v146, %v145
    %163 = vmatpush.bf16.msra.mxu0 %v154
    %164 = vmatpush.bf16.msra.mxu0 %v153
    %165 = vmatpush.bf16.msra.mxu0 %v152
    %166 = vmatpush.bf16.msra.mxu0 %v151
    %167 = vmatpush.bf16.msra.mxu0 %v150
    %168 = vmatpush.bf16.msra.mxu0 %v149
    %169 = vmatpush.bf16.msra.mxu0 %v148
    %170 = vmatpush.bf16.msra.mxu0 %v147
    %171 = vmatmul.bf16.gmra.mxu0 %v77
    %v172 = vpop.f32.mrf.mxu0
    %v173 = vadd.f32 %v112, %v172
    %v174 = vpop.f32.mrf.mxu0
    %175 = vdwg.mxu0
    %v176 = vld [vmem:[%s6] sm:$0x1]
    %v178 = vperm.slane %v176, 0
    %v180 = vadd.f32 %v173, %v178
    %v181 = vmax.f32 %v180, 0.0
    %v182 = vld [vmem:[%s7] sm:$0x1]
    %v184 = vperm.slane %v182, 0
    %v186 = vmul.f32 %v181, %v184
    %187 = vadd.xlane.f32.xlu0 %v186
    %v188 = vpop.xlane.xlu0 %187
    %v189 = vld [vmem:[%s8] sm:$0x1]
    %v191 = vperm.slane %v189, 0
    %v193 = vadd.f32 %v188, %v191
    %194 = vst.msk [vmem:[%s9] sm:$0xff] %vm55, %v193
    // Predicated region
    $region42: #{critic_forward.1} parent=1 // pred_check
      _
    $region43: #{critic_forward.1} parent=1 // pred_check_branch
      %196 = sbr.rel (0) target = $region45
    $region44: #{critic_forward.1} parent=1 // pred_region
      _
    $region45: #{critic_forward.1} parent=1 // pred_fallthru
      _
    // Predicated region
    $region46: #{critic_forward.1} parent=1 // pred_check
      _
    $region47: #{critic_forward.1} parent=1 // pred_check_branch
      %198 = sbr.rel (0) target = $region49
    $region48: #{critic_forward.1} parent=1 // pred_region
      _
    $region49: #{critic_forward.1} parent=1 // pred_fallthru
      _
    %199 = vsyncpa [#allocation3], 1

</llo_original>
